<compile_context>
chip_gen: v7x
topology: tpu7x:2x2x1
jax: 0.10.0
libtpu: 0.0.40
codegen_flags: <defaults>
</compile_context>

<pallas_src>
import functools

import jax
import jax.numpy as jnp
from jax.experimental import pallas as pl
from jax.experimental.pallas import tpu as pltpu


def _round_up(n, m):
    return ((n + m - 1) // m) * m


# ----------------------------------------------------------------------------
# Fused kernel (one grid step = one TB-row slab of the batch):
#   x_ref   : (TB, D_in)   streamed per step
#   w1t_ref : (D_in, H)    fc1 weight, pre-transposed, VMEM-resident
#   b1_ref  : (1, H)       VMEM-resident
#   w2t_ref : (H, D_out)   fc2 weight, pre-transposed, VMEM-resident
#   b2_ref  : (1, D_out)   VMEM-resident
#   out_ref : (TB, D_out)  L2-normalized along dim=1, streamed per step
# ----------------------------------------------------------------------------
def att_encoder_kernel(x_ref, w1t_ref, b1_ref, w2t_ref, b2_ref, out_ref):
    x = x_ref[...]
    h = jnp.dot(x, w1t_ref[...],
                preferred_element_type=jnp.float32) + b1_ref[...]     # (TB, H)
    h = jnp.maximum(h, 0.0)                                           # ReLU (VPU)
    y = jnp.dot(h.astype(w2t_ref.dtype), w2t_ref[...],
                preferred_element_type=jnp.float32) + b2_ref[...]     # (TB, D_out)
    # torch.nn.functional.normalize(y, p=2, dim=1): y / max(||y||_2, 1e-12)
    # rsqrt(max(sq, eps^2)) == 1 / max(sqrt(sq), eps)  (sqrt is monotone)
    sq = jnp.sum(y * y, axis=1, keepdims=True)                        # (TB, 1)
    inv = jax.lax.rsqrt(jnp.maximum(sq, 1e-24))                       # EUP
    out_ref[...] = (y * inv).astype(out_ref.dtype)


def att_encoder_forward(x, params, *, block_rows=512):
    """x: (B, att_DIM) float32 -> (B, att_outDIM), L2-normalized per row."""
    w1t, b1, w2t, b2 = params
    B, d_in = x.shape
    h_dim = w1t.shape[1]
    d_out = w2t.shape[1]

    # Row tile: multiple of 8 (sublane granularity), capped at block_rows.
    tb = _round_up(min(block_rows, _round_up(B, 8)), 8)
    b_pad = _round_up(B, tb)
    if b_pad != B:
        x = jnp.pad(x, ((0, b_pad - B), (0, 0)))

    grid = (b_pad // tb,)

    out = pl.pallas_call(
        att_encoder_kernel,
        out_shape=jax.ShapeDtypeStruct((b_pad, d_out), jnp.float32),
        grid=grid,
        in_specs=[
            # x streams through VMEM, double-buffered by the Pallas pipeline.
            pl.BlockSpec((tb, d_in), lambda i: (i, 0)),
            # Weights / biases: constant index_map -> VMEM-resident across steps.
            pl.BlockSpec((d_in, h_dim), lambda i: (0, 0)),
            pl.BlockSpec((1, h_dim), lambda i: (0, 0)),
            pl.BlockSpec((h_dim, d_out), lambda i: (0, 0)),
            pl.BlockSpec((1, d_out), lambda i: (0, 0)),
        ],
        out_specs=pl.BlockSpec((tb, d_out), lambda i: (i, 0)),
        compiler_params=pltpu.CompilerParams(
            dimension_semantics=("parallel",),
            vmem_limit_bytes=32 * 1024 * 1024,
        ),
    )(x, w1t, b1, w2t, b2)

    return out[:B] if b_pad != B else out


# ----------------------------------------------------------------------------
# Deterministic parameter init matching the PyTorch module:
#   weights: xavier_uniform_, biases: default nn.Linear uniform(-1/sqrt(fan_in))
# Weights are stored already transposed (in, out); biases as (1, out).
# ----------------------------------------------------------------------------
def init_att_encoder_params(key, att_dim, att_hid_dim, att_out_dim):
    k1, k2, k3, k4 = jax.random.split(key, 4)

    def xavier(k, fan_in, fan_out):
        limit = jnp.sqrt(6.0 / (fan_in + fan_out))
        return jax.random.uniform(k, (fan_in, fan_out), jnp.float32,
                                  -limit, limit)

    def bias(k, fan_in, fan_out):
        bound = 1.0 / jnp.sqrt(fan_in)
        return jax.random.uniform(k, (1, fan_out), jnp.float32, -bound, bound)

    w1t = xavier(k1, att_dim, att_hid_dim)
    b1 = bias(k2, att_dim, att_hid_dim)
    w2t = xavier(k3, att_hid_dim, att_out_dim)
    b2 = bias(k4, att_hid_dim, att_out_dim)
    return (w1t, b1, w2t, b2)


# ----------------------------------------------------------------------------
# Pure-JAX reference (same semantics) for verification
# ----------------------------------------------------------------------------
def ref_forward(x, params):
    w1t, b1, w2t, b2 = params
    h = jnp.maximum(x @ w1t + b1, 0.0)
    y = h @ w2t + b2
    denom = jnp.maximum(jnp.linalg.norm(y, axis=1, keepdims=True), 1e-12)
    return y / denom


if __name__ == "__main__":
    att_DIM = 16
    att_hidDIM = 32
    att_outDIM = 32

    key = jax.random.PRNGKey(0)
    kx, kx2, kp = jax.random.split(key, 3)
    params = init_att_encoder_params(kp, att_DIM, att_hidDIM, att_outDIM)

    # --- small-shape check (single grid step, batch padded 2 -> 8) ----------
    B = 2
    x = jax.random.normal(kx, (B, att_DIM), jnp.float32)
    out = jax.block_until_ready(att_encoder_forward(x, params))
    assert out.shape == (B, att_outDIM), out.shape
    assert bool(jnp.all(jnp.isfinite(out)))
    ref = ref_forward(x, params)
    assert bool(jnp.allclose(out, ref, atol=1e-5, rtol=1e-5)), (
        float(jnp.max(jnp.abs(out - ref))))
    norms = jnp.linalg.norm(out, axis=1)
    assert bool(jnp.allclose(norms, jnp.ones_like(norms), atol=1e-5))

    # --- multi-step grid check (exercise tiling + remainder padding) -------
    B2 = 20
    x2 = jax.random.normal(kx2, (B2, att_DIM), jnp.float32)
    out2 = jax.block_until_ready(
        att_encoder_forward(x2, params, block_rows=8))   # grid of 3 steps
    ref2 = ref_forward(x2, params)
    assert out2.shape == (B2, att_outDIM), out2.shape
    assert bool(jnp.allclose(out2, ref2, atol=1e-5, rtol=1e-5)), (
        float(jnp.max(jnp.abs(out2 - ref2))))

    print("KERNEL_OK")
</pallas_src>

<mosaic_0001>
module attributes {stable_mosaic.version = 11 : i64} {
  func.func @att_encoder_kernel(%arg0: i32, %arg1: memref<8x16xf32, #tpu.memory_space<vmem>>, %arg2: memref<16x32xf32, #tpu.memory_space<vmem>>, %arg3: memref<1x32xf32, #tpu.memory_space<vmem>>, %arg4: memref<32x32xf32, #tpu.memory_space<vmem>>, %arg5: memref<1x32xf32, #tpu.memory_space<vmem>>, %arg6: memref<8x32xf32, #tpu.memory_space<vmem>>) attributes {dimension_semantics = [#tpu.dimension_semantics<parallel>], iteration_bounds = array<i64: 1>, scalar_prefetch = 0 : i64, scratch_operands = 0 : i64, tpu.core_type = #tpu.core_type<tc>, window_params = [{transform_indices = @transform_0, window_bounds = array<i64: 8, 16>}, {pipeline_mode = #tpu.pipeline_mode<synchronous>, transform_indices = @transform_1, window_bounds = array<i64: 16, 32>}, {pipeline_mode = #tpu.pipeline_mode<synchronous>, transform_indices = @transform_2, window_bounds = array<i64: 1, 32>}, {pipeline_mode = #tpu.pipeline_mode<synchronous>, transform_indices = @transform_3, window_bounds = array<i64: 32, 32>}, {pipeline_mode = #tpu.pipeline_mode<synchronous>, transform_indices = @transform_4, window_bounds = array<i64: 1, 32>}, {transform_indices = @transform_5, window_bounds = array<i64: 8, 32>}]} {
    %c0 = arith.constant 0 : index
    %c0_0 = arith.constant 0 : index
    %0 = vector.load %arg1[%c0, %c0_0] : memref<8x16xf32, #tpu.memory_space<vmem>>, vector<8x16xf32>
    %c0_1 = arith.constant 0 : index
    %c0_2 = arith.constant 0 : index
    %1 = vector.load %arg2[%c0_1, %c0_2] : memref<16x32xf32, #tpu.memory_space<vmem>>, vector<16x32xf32>
    %cst = arith.constant dense<0.000000e+00> : vector<8x32xf32>
    %2 = tpu.matmul %0, %1, %cst {dimension_numbers = #tpu.dot_dimension_numbers<[1], [0], [0], [1], [0, 0, 1, 1], [], []>} : vector<8x16xf32>, vector<16x32xf32>, vector<8x32xf32> -> vector<8x32xf32>
    %c0_3 = arith.constant 0 : index
    %c0_4 = arith.constant 0 : index
    %3 = vector.load %arg3[%c0_3, %c0_4] : memref<1x32xf32, #tpu.memory_space<vmem>>, vector<1x32xf32>
    %4 = vector.broadcast %3 : vector<1x32xf32> to vector<8x32xf32>
    %5 = arith.addf %2, %4 : vector<8x32xf32>
    %cst_5 = arith.constant 0.000000e+00 : f32
    %6 = vector.broadcast %cst_5 : f32 to vector<8x32xf32>
    %7 = arith.maximumf %5, %6 : vector<8x32xf32>
    %c0_6 = arith.constant 0 : index
    %c0_7 = arith.constant 0 : index
    %8 = vector.load %arg4[%c0_6, %c0_7] : memref<32x32xf32, #tpu.memory_space<vmem>>, vector<32x32xf32>
    %cst_8 = arith.constant dense<0.000000e+00> : vector<8x32xf32>
    %9 = tpu.matmul %7, %8, %cst_8 {dimension_numbers = #tpu.dot_dimension_numbers<[1], [0], [0], [1], [0, 0, 1, 1], [], []>} : vector<8x32xf32>, vector<32x32xf32>, vector<8x32xf32> -> vector<8x32xf32>
    %c0_9 = arith.constant 0 : index
    %c0_10 = arith.constant 0 : index
    %10 = vector.load %arg5[%c0_9, %c0_10] : memref<1x32xf32, #tpu.memory_space<vmem>>, vector<1x32xf32>
    %11 = vector.broadcast %10 : vector<1x32xf32> to vector<8x32xf32>
    %12 = arith.addf %9, %11 : vector<8x32xf32>
    %13 = arith.mulf %12, %12 : vector<8x32xf32>
    %cst_11 = arith.constant dense<0.000000e+00> : vector<8xf32>
    %14 = vector.multi_reduction <add>, %13, %cst_11 [1] : vector<8x32xf32> to vector<8xf32>
    %15 = vector.shape_cast %14 : vector<8xf32> to vector<8x1xf32>
    %cst_12 = arith.constant 1.000000e-24 : f32
    %16 = vector.broadcast %cst_12 : f32 to vector<8x1xf32>
    %17 = arith.maximumf %15, %16 : vector<8x1xf32>
    %18 = math.rsqrt %17 : vector<8x1xf32>
    %19 = vector.broadcast %18 : vector<8x1xf32> to vector<8x32xf32>
    %20 = arith.mulf %12, %19 : vector<8x32xf32>
    %c0_13 = arith.constant 0 : index
    %c0_14 = arith.constant 0 : index
    %21 = vector.load %arg6[%c0_13, %c0_14] : memref<8x32xf32, #tpu.memory_space<vmem>>, vector<8x32xf32>
    tpu.vector_store %arg6[%c0_13, %c0_14], %20 {strides = array<i32>} : memref<8x32xf32, #tpu.memory_space<vmem>>, vector<8x32xf32>,
    return
  }
  func.func @transform_0(%arg0: i32) -> (i32, i32) {
    %c0_i32 = arith.constant 0 : i32
    %c0_i32_0 = arith.constant 0 : i32
    return %arg0, %c0_i32 : i32, i32
  }
  func.func @transform_1(%arg0: i32) -> (i32, i32) {
    %c0_i32 = arith.constant 0 : i32
    %c0_i32_0 = arith.constant 0 : i32
    %c0_i32_1 = arith.constant 0 : i32
    return %c0_i32, %c0_i32_0 : i32, i32
  }
  func.func @transform_2(%arg0: i32) -> (i32, i32) {
    %c0_i32 = arith.constant 0 : i32
    %c0_i32_0 = arith.constant 0 : i32
    %c0_i32_1 = arith.constant 0 : i32
    return %c0_i32, %c0_i32_0 : i32, i32
  }
  func.func @transform_3(%arg0: i32) -> (i32, i32) {
    %c0_i32 = arith.constant 0 : i32
    %c0_i32_0 = arith.constant 0 : i32
    %c0_i32_1 = arith.constant 0 : i32
    return %c0_i32, %c0_i32_0 : i32, i32
  }
  func.func @transform_4(%arg0: i32) -> (i32, i32) {
    %c0_i32 = arith.constant 0 : i32
    %c0_i32_0 = arith.constant 0 : i32
    %c0_i32_1 = arith.constant 0 : i32
    return %c0_i32, %c0_i32_0 : i32, i32
  }
  func.func @transform_5(%arg0: i32) -> (i32, i32) {
    %c0_i32 = arith.constant 0 : i32
    %c0_i32_0 = arith.constant 0 : i32
    return %arg0, %c0_i32 : i32, i32
  }
}

</mosaic_0001>

<llo_original>
// kernel: tpu_custom_call.1
$region0: #{tpu_custom_call.1}
  #allocation0 [shape = 'u32[]', space=smem, size = 0x4, offset = 0x4, fixed_abs, tag = 'smem constant byte address 0x4 - core index']
  #allocation1 [shape = 'u32[144,128]{1,0:T(1,128)}', space=vmem, size = 0x12000, scoped, tag = 'internal scratch']
  %s0 = inlined_call_operand.hbm [shape: f32[8,16], index: 0, kind: input, shape index: {}]
  %s1 = inlined_call_operand.hbm [shape: f32[16,32], index: 1, kind: input, shape index: {}]
  %s2 = inlined_call_operand.vmem [shape: f32[1,32], index: 2, kind: input, shape index: {}]
  %s3 = inlined_call_operand.hbm [shape: f32[32,32], index: 3, kind: input, shape index: {}]
  %s4 = inlined_call_operand.vmem [shape: f32[1,32], index: 4, kind: input, shape index: {}]
  %s5 = inlined_call_operand.hbm [shape: f32[8,32], index: 5, kind: output, shape index: {}]
  %s6 = sld [smem:[#allocation0]]
  $region42: #{tpu_custom_call.1} parent=0
    _
  %s8 = ssub.s32 1, %s6
  %s9 = scalar_select 0, %s8, %s6
  $region1: #{tpu_custom_call.1} parent=0
    #allocation2 [shape = 'u8[4096]{0}', space=vmem, size = 0x1000, scoped, tag = 'input window, operand 0, single buffered']
    #allocation3 [shape = 's32[1]{0}', space=sflag, size = 0x4, scoped, tag = 'scoped memory for tpu_custom_call.1']
    #allocation4 [shape = 's32[1]{0}', space=sflag, size = 0x4, scoped, tag = 'scoped memory for tpu_custom_call.1']
    #allocation5 [shape = 'u8[8192]{0}', space=vmem, size = 0x2000, scoped, tag = 'input window, operand 1, single buffered']
    #allocation6 [shape = 's32[1]{0}', space=sflag, size = 0x4, scoped, tag = 'scoped memory for tpu_custom_call.1']
    #allocation7 [shape = 'u8[16384]{0}', space=vmem, size = 0x4000, scoped, tag = 'input window, operand 3, single buffered']
    #allocation8 [shape = 'u8[4096]{0}', space=vmem, size = 0x1000, scoped, tag = 'output window, operand 0, single buffered']
    %10 = vsyncpa [#allocation3], 0
    %11 = vsyncpa [#allocation6], 0
    %12 = vsyncpa [#allocation4], 0
    // Predicated region
    $region2: #{tpu_custom_call.1} parent=1 // pred_check
      _
    $region3: #{tpu_custom_call.1} parent=1 // pred_check_branch
      %14 = sbr.rel (0) target = $region5
    $region4: #{tpu_custom_call.1} parent=1 // pred_region
      %s16 = ssub.s32 128, 128
      %17 = vsyncadd [#allocation3], %s16
      %s19 = sshll.u32 [#allocation2], 4
      %s20 = int_to_ptr.vmem [resolvable:$true] %s19
      %22 = dma.hbm_to_vmem [thread:$0]  %s0, 128, %s20, [#allocation3]
    $region5: #{tpu_custom_call.1} parent=1 // pred_fallthru
      _
    // Predicated region
    $region6: #{tpu_custom_call.1} parent=1 // pred_check
      _
    $region7: #{tpu_custom_call.1} parent=1 // pred_check_branch
      %24 = sbr.rel (0) target = $region9
    $region8: #{tpu_custom_call.1} parent=1 // pred_region
      %s26 = ssub.s32 256, 256
      %27 = vsyncadd [#allocation6], %s26
      %s28 = sshll.u32 [#allocation5], 4
      %s29 = int_to_ptr.vmem [resolvable:$true] %s28
      %34 = dma.hbm_to_vmem [thread:$0]  %s1, 256, %s29, [#allocation6], 128, 128, 8
    $region9: #{tpu_custom_call.1} parent=1 // pred_fallthru
      _
    // Predicated region
    $region10: #{tpu_custom_call.1} parent=1 // pred_check
      _
    $region11: #{tpu_custom_call.1} parent=1 // pred_check_branch
      %36 = sbr.rel (0) target = $region13
    $region12: #{tpu_custom_call.1} parent=1 // pred_region
      _
    $region13: #{tpu_custom_call.1} parent=1 // pred_fallthru
      _
    // Predicated region
    $region14: #{tpu_custom_call.1} parent=1 // pred_check
      _
    $region15: #{tpu_custom_call.1} parent=1 // pred_check_branch
      %38 = sbr.rel (0) target = $region17
    $region16: #{tpu_custom_call.1} parent=1 // pred_region
      %s40 = ssub.s32 512, 512
      %41 = vsyncadd [#allocation6], %s40
      %s42 = sshll.u32 [#allocation7], 4
      %s43 = int_to_ptr.vmem [resolvable:$true] %s42
      %48 = dma.hbm_to_vmem [thread:$0]  %s3, 512, %s43, [#allocation6], 128, 128, 8
    $region17: #{tpu_custom_call.1} parent=1 // pred_fallthru
      _
    // Predicated region
    $region18: #{tpu_custom_call.1} parent=1 // pred_check
      _
    $region19: #{tpu_custom_call.1} parent=1 // pred_check_branch
      %50 = sbr.rel (0) target = $region21
    $region20: #{tpu_custom_call.1} parent=1 // pred_region
      _
    $region21: #{tpu_custom_call.1} parent=1 // pred_fallthru
      _
    // Predicated region
    $region22: #{tpu_custom_call.1} parent=1 // pred_check
      _
    $region23: #{tpu_custom_call.1} parent=1 // pred_check_branch
      %52 = sbr.rel (0) target = $region25
    $region24: #{tpu_custom_call.1} parent=1 // pred_region
      %53 = dma.done [#allocation3], 128
    $region25: #{tpu_custom_call.1} parent=1 // pred_fallthru
      _
    // Predicated region
    $region26: #{tpu_custom_call.1} parent=1 // pred_check
      _
    $region27: #{tpu_custom_call.1} parent=1 // pred_check_branch
      %55 = sbr.rel (0) target = $region29
    $region28: #{tpu_custom_call.1} parent=1 // pred_region
      %56 = dma.done [#allocation6], 256
    $region29: #{tpu_custom_call.1} parent=1 // pred_fallthru
      _
    // Predicated region
    $region30: #{tpu_custom_call.1} parent=1 // pred_check
      _
    $region31: #{tpu_custom_call.1} parent=1 // pred_check_branch
      %58 = sbr.rel (0) target = $region33
    $region32: #{tpu_custom_call.1} parent=1 // pred_region
      %59 = dma.done [#allocation6], 512
    $region33: #{tpu_custom_call.1} parent=1 // pred_fallthru
      _
    %v60 = vld [vmem:[#allocation2] sm:$0xff]
    %v61 = vld [vmem:[#allocation5] sm:$0xff]
    %v62 = vld [vmem:[#allocation5 + $0x8] sm:$0xff]
    %v63 = vld [vmem:[%s2] sm:$0x1]
    %v65 = vlaneseq
    %v66 = vshrl.u32 %v65, 7
    %v67 = vsub.s32 0, %v66
    %v68 = vrot.slane %v63, %v67
    %vm70 = vcmask 130048
    %v72 = vsel %vm70, %v60, 0
    %74 = vmatprep.subr.mxu0 0.0
    %75 = vmatpush1.msra.mxu0 %v61
    %76 = vmatprep.subr.mxu0 0.0
    %77 = vmatpush1.msra.mxu0 %v62
    %78 = vmatprep.subr.mxu0 0.0
    %79 = vmatpush1.msra.mxu0 0.0
    %80 = vmatprep.subr.mxu0 0.0
    %81 = vmatpush1.msra.mxu0 0.0
    %82 = vmatprep.subr.mxu0 0.0
    %83 = vmatpush1.msra.mxu0 0.0
    %84 = vmatprep.subr.mxu0 0.0
    %85 = vmatpush1.msra.mxu0 0.0
    %86 = vmatprep.subr.mxu0 0.0
    %87 = vmatpush1.msra.mxu0 0.0
    %88 = vmatprep.subr.mxu0 0.0
    %89 = vmatpush1.msra.mxu0 0.0
    %90 = vmatprep.subr.mxu0 0.0
    %91 = vmatpush1.msra.mxu0 0.0
    %92 = vmatprep.subr.mxu0 0.0
    %93 = vmatpush1.msra.mxu0 0.0
    %94 = vmatprep.subr.mxu0 0.0
    %95 = vmatpush1.msra.mxu0 0.0
    %96 = vmatprep.subr.mxu0 0.0
    %97 = vmatpush1.msra.mxu0 0.0
    %98 = vmatprep.subr.mxu0 0.0
    %99 = vmatpush1.msra.mxu0 0.0
    %100 = vmatprep.subr.mxu0 0.0
    %101 = vmatpush1.msra.mxu0 0.0
    %102 = vmatprep.subr.mxu0 0.0
    %103 = vmatpush1.msra.mxu0 0.0
    %104 = vmatprep.subr.mxu0 0.0
    %105 = vmatpush1.msra.mxu0 0.0
    %106 = vmatprep.subr.mxu0 0.0
    %107 = vmatpush1.msra.mxu0 0.0
    %108 = vmatprep.subr.mxu0 0.0
    %109 = vmatpush1.msra.mxu0 0.0
    %110 = vmatprep.subr.mxu0 0.0
    %111 = vmatpush1.msra.mxu0 0.0
    %112 = vmatprep.subr.mxu0 0.0
    %113 = vmatpush1.msra.mxu0 0.0
    %114 = vmatprep.subr.mxu0 0.0
    %115 = vmatpush1.msra.mxu0 0.0
    %116 = vmatprep.subr.mxu0 0.0
    %117 = vmatpush1.msra.mxu0 0.0
    %118 = vmatprep.subr.mxu0 0.0
    %119 = vmatpush1.msra.mxu0 0.0
    %120 = vmatprep.subr.mxu0 0.0
    %121 = vmatpush1.msra.mxu0 0.0
    %122 = vmatprep.subr.mxu0 0.0
    %123 = vmatpush1.msra.mxu0 0.0
    %124 = vmatprep.subr.mxu0 0.0
    %125 = vmatpush1.msra.mxu0 0.0
    %126 = vmatprep.subr.mxu0 0.0
    %127 = vmatpush1.msra.mxu0 0.0
    %128 = vmatprep.subr.mxu0 0.0
    %129 = vmatpush1.msra.mxu0 0.0
    %130 = vmatprep.subr.mxu0 0.0
    %131 = vmatpush1.msra.mxu0 0.0
    %132 = vmatprep.subr.mxu0 0.0
    %133 = vmatpush1.msra.mxu0 0.0
    %134 = vmatprep.subr.mxu0 0.0
    %135 = vmatpush1.msra.mxu0 0.0
    %136 = vmatprep.subr.mxu0 0.0
    %137 = vmatpush1.msra.mxu0 0.0
    %138 = vmatprep.mubr.f32.mxu0 0.0
    %139 = vmatmul.mubr.f32.gmra.mrb[0].mxu0 %v72
    %v140 = vpop.f32.mrb[0].mxu0
    %v141 = vadd.f32 %v68, %v140
    %v142 = vpop.f32.mrb[0].mxu0
    %143 = vdwg.mxu0
    %v144 = vmax.f32 %v141, 0.0
    %v145 = vld [vmem:[#allocation7] sm:$0xff]
    %v146 = vld [vmem:[#allocation7 + $0x8] sm:$0xff]
    %v147 = vld [vmem:[#allocation7 + $0x10] sm:$0xff]
    %v148 = vld [vmem:[#allocation7 + $0x18] sm:$0xff]
    %v149 = vld [vmem:[%s4] sm:$0x1]
    %v151 = vlaneseq
    %v152 = vshrl.u32 %v151, 7
    %v153 = vsub.s32 0, %v152
    %v154 = vrot.slane %v149, %v153
    %vm156 = vcmask 261120
    %v158 = vsel %vm156, %v144, 0
    %160 = vmatprep.subr.mxu0 0.0
    %161 = vmatpush1.msra.mxu0 %v145
    %162 = vmatprep.subr.mxu0 0.0
    %163 = vmatpush1.msra.mxu0 %v146
    %164 = vmatprep.subr.mxu0 0.0
    %165 = vmatpush1.msra.mxu0 %v147
    %166 = vmatprep.subr.mxu0 0.0
    %167 = vmatpush1.msra.mxu0 %v148
    %168 = vmatprep.subr.mxu0 0.0
    %169 = vmatpush1.msra.mxu0 0.0
    %170 = vmatprep.subr.mxu0 0.0
    %171 = vmatpush1.msra.mxu0 0.0
    %172 = vmatprep.subr.mxu0 0.0
    %173 = vmatpush1.msra.mxu0 0.0
    %174 = vmatprep.subr.mxu0 0.0
    %175 = vmatpush1.msra.mxu0 0.0
    %176 = vmatprep.subr.mxu0 0.0
    %177 = vmatpush1.msra.mxu0 0.0
    %178 = vmatprep.subr.mxu0 0.0
    %179 = vmatpush1.msra.mxu0 0.0
    %180 = vmatprep.subr.mxu0 0.0
    %181 = vmatpush1.msra.mxu0 0.0
    %182 = vmatprep.subr.mxu0 0.0
    %183 = vmatpush1.msra.mxu0 0.0
    %184 = vmatprep.subr.mxu0 0.0
    %185 = vmatpush1.msra.mxu0 0.0
    %186 = vmatprep.subr.mxu0 0.0
    %187 = vmatpush1.msra.mxu0 0.0
    %188 = vmatprep.subr.mxu0 0.0
    %189 = vmatpush1.msra.mxu0 0.0
    %190 = vmatprep.subr.mxu0 0.0
    %191 = vmatpush1.msra.mxu0 0.0
    %192 = vmatprep.subr.mxu0 0.0
    %193 = vmatpush1.msra.mxu0 0.0
    %194 = vmatprep.subr.mxu0 0.0
    %195 = vmatpush1.msra.mxu0 0.0
    %196 = vmatprep.subr.mxu0 0.0
    %197 = vmatpush1.msra.mxu0 0.0
    %198 = vmatprep.subr.mxu0 0.0
    %199 = vmatpush1.msra.mxu0 0.0
    %200 = vmatprep.subr.mxu0 0.0
    %201 = vmatpush1.msra.mxu0 0.0
    %202 = vmatprep.subr.mxu0 0.0
    %203 = vmatpush1.msra.mxu0 0.0
    %204 = vmatprep.subr.mxu0 0.0
    %205 = vmatpush1.msra.mxu0 0.0
    %206 = vmatprep.subr.mxu0 0.0
    %207 = vmatpush1.msra.mxu0 0.0
    %208 = vmatprep.subr.mxu0 0.0
    %209 = vmatpush1.msra.mxu0 0.0
    %210 = vmatprep.subr.mxu0 0.0
    %211 = vmatpush1.msra.mxu0 0.0
    %212 = vmatprep.subr.mxu0 0.0
    %213 = vmatpush1.msra.mxu0 0.0
    %214 = vmatprep.subr.mxu0 0.0
    %215 = vmatpush1.msra.mxu0 0.0
    %216 = vmatprep.subr.mxu0 0.0
    %217 = vmatpush1.msra.mxu0 0.0
    %218 = vmatprep.subr.mxu0 0.0
    %219 = vmatpush1.msra.mxu0 0.0
    %220 = vmatprep.subr.mxu0 0.0
    %221 = vmatpush1.msra.mxu0 0.0
    %222 = vmatprep.subr.mxu0 0.0
    %223 = vmatpush1.msra.mxu0 0.0
    %224 = vmatprep.mubr.f32.mxu0 0.0
    %225 = vmatmul.mubr.f32.gmra.mrb[0].mxu0 %v158
    %v226 = vpop.f32.mrb[0].mxu0
    %v227 = vadd.f32 %v154, %v226
    %v228 = vpop.f32.mrb[0].mxu0
    %229 = vdwg.mxu0
    %v230 = vmul.f32 %v227, %v227
    %v231 = vsel %vm156, %v230, 0.0
    %232 = vadd.xlane.f32.xlu0 %v231
    %v233 = vpop.xlane.xlu0 %232
    %v234 = vmax.f32 %v233, 1e-24
    %v235 = vrsqrt.pop %v234
    %v236 = vmul.f32 %v227, %v235
    %237 = vst.msk [vmem:[#allocation8] sm:$0xff] %vm156, %v236
    // Predicated region
    $region34: #{tpu_custom_call.1} parent=1 // pred_check
      _
    $region35: #{tpu_custom_call.1} parent=1 // pred_check_branch
      %239 = sbr.rel (0) target = $region37
    $region36: #{tpu_custom_call.1} parent=1 // pred_region
      %s241 = ssub.s32 128, 128
      %242 = vsyncadd [#allocation4], %s241
      %s244 = sshll.u32 [#allocation8], 4
      %s245 = int_to_ptr.vmem [resolvable:$true] %s244
      %247 = dma.vmem_to_hbm [thread:$0]  %s245, 128, %s5, [#allocation4]
    $region37: #{tpu_custom_call.1} parent=1 // pred_fallthru
      _
    // Predicated region
    $region38: #{tpu_custom_call.1} parent=1 // pred_check
      _
    $region39: #{tpu_custom_call.1} parent=1 // pred_check_branch
      %249 = sbr.rel (0) target = $region41
    $region40: #{tpu_custom_call.1} parent=1 // pred_region
      %250 = dma.done [#allocation4], 128
    $region41: #{tpu_custom_call.1} parent=1 // pred_fallthru
      _
    %251 = vsyncpa [#allocation3], 1
    %252 = vsyncpa [#allocation6], 1
    %253 = vsyncpa [#allocation4], 1

</llo_original>
